<compile_context>
chip_gen: v5e
topology: v5e:2x2
jax: 0.10.0
libtpu: 0.0.40
codegen_flags: <defaults>
</compile_context>

<pallas_src>
import jax
import jax.numpy as jnp
from jax.experimental import pallas as pl
from jax.experimental.pallas import tpu as pltpu


def _round_up(x, m):
    return (x + m - 1) // m * m


def _vmem_budget_bytes():
    """~75% of physical VMEM per TensorCore (96 MiB v5e/v6e, 48 MiB v7x)."""
    try:
        cap = int(pltpu.get_tpu_info().vmem_capacity_bytes)
    except Exception:
        cap = 128 * 1024 * 1024  # v5e/v6e default
    return max((cap * 3) // 4, 32 * 1024 * 1024)


def _tile_vmem_bytes(tm, tn, tk, in_item, out_item, use_scratch):
    # double-buffered x / weight / output tiles + (8, tn) bias tile (+ f32 acc)
    return (2 * (tm * tk + tk * tn) * in_item
            + 2 * 8 * tn * 4
            + 2 * tm * tn * out_item
            + (tm * tn * 4 if use_scratch else 0))


def _choose_tiles(B, w_in, w_out, in_item, out_item, use_scratch, budget):
    sub = max(8, 32 // in_item)            # 8 (f32) / 16 (bf16) / 32 (int8) sublanes
    lane_n = 256 if w_out > 128 else 128   # fill the 2x256 MXU on v6e/v7x
    Mp = _round_up(B, sub)
    Kp = _round_up(w_in, 128)
    Np = _round_up(w_out, lane_n)

    tm = min(512, Mp)

    def cands(full, prefs):
        c = [full]
        for p in prefs:
            if p < full and p % 128 == 0:
                c.append(p)
        return c

    # Large K tiles amortize the ~0.35 us per-grid-step overhead; large N tiles
    # cut x re-streaming (x is refetched once per N tile).  Full extents first
    # so small/medium MLPs stream the weight from HBM exactly once.
    for tk in cands(Kp, (2048, 1536, 1024, 512, 256, 128)):
        for tn in cands(Np, (1024, 768, 512, 384, 256, 128)):
            if _tile_vmem_bytes(tm, tn, tk, in_item, out_item, use_scratch) <= budget:
                return tm, tn, tk
    return tm, 128, 128  # practically unreachable


def _mlp_kernel_acc_in_out(x_ref, w_ref, b_ref, o_ref):
    """out dtype == f32: accumulate directly into the resident output block."""
    k = pl.program_id(2)

    @pl.when(k == 0)
    def _():
        o_ref[...] = jnp.zeros_like(o_ref)

    o_ref[...] += jnp.dot(x_ref[...], w_ref[...],
                          preferred_element_type=jnp.float32)

    @pl.when(k == pl.num_programs(2) - 1)
    def _():
        o_ref[...] = jnp.maximum(o_ref[...] + b_ref[...], 0.0)


def _mlp_kernel_acc_scratch(x_ref, w_ref, b_ref, o_ref, acc_ref):
    """Narrow output dtype: f32 VMEM accumulator, cast once in the finalize."""
    k = pl.program_id(2)

    @pl.when(k == 0)
    def _():
        acc_ref[...] = jnp.zeros_like(acc_ref)

    acc_ref[...] += jnp.dot(x_ref[...], w_ref[...],
                            preferred_element_type=jnp.float32)

    @pl.when(k == pl.num_programs(2) - 1)
    def _():
        o_ref[...] = jnp.maximum(acc_ref[...] + b_ref[...], 0.0).astype(o_ref.dtype)


def mlp_block(x, weight, bias, *, compute_dtype=None, input_buffering=2):
    """ReLU(x @ weight.T + bias), weight in PyTorch nn.Linear (w_out, w_in) layout."""
    orig_lead = x.shape[:-1]
    w_in = x.shape[-1]
    w_out, w_in_w = weight.shape
    assert w_in == w_in_w and bias.shape == (w_out,)

    x2 = x.reshape(-1, w_in)
    B = x2.shape[0]
    out_dtype = x.dtype

    if compute_dtype is not None:
        # bf16 MXU path on v6e/v7x (accumulation stays f32 in the kernel).
        x2 = x2.astype(compute_dtype)
        weight = weight.astype(compute_dtype)

    in_item = jnp.dtype(x2.dtype).itemsize
    out_item = jnp.dtype(out_dtype).itemsize
    out_is_f32 = jnp.dtype(out_dtype) == jnp.dtype(jnp.float32)
    use_scratch = not out_is_f32

    budget = _vmem_budget_bytes()
    tm, tn, tk = _choose_tiles(B, w_in, w_out, in_item, out_item, use_scratch, budget)

    Bp = _round_up(B, tm)
    Kp = _round_up(w_in, tk)
    Np = _round_up(w_out, tn)

    # v7x megacore: give both TensorCores a parallel tile when the problem is
    # large enough (negligible extra step cost on single-TC chips).
    if (Bp // tm) * (Np // tn) == 1 and tn >= 512 and tn % 256 == 0:
        tn //= 2

    # Zero-pad to tile multiples (no-op when aligned; padded K contributes 0,
    # padded N columns are ReLU(0+0)=0 and sliced off).
    if (Bp, Kp) != (B, w_in):
        # TODO(synk): for very large unaligned activations, handle the ragged
        # M/K edge in-kernel (masked epilogue / pl.BoundedSlice) instead of
        # this extra HBM pass over x.
        x2 = jnp.pad(x2, ((0, Bp - B), (0, Kp - w_in)))
    w_t = weight.T  # (w_in, w_out): canonical (K, N) layout, one-time transpose
    if (Kp, Np) != (w_in, w_out):
        w_t = jnp.pad(w_t, ((0, Kp - w_in), (0, Np - w_out)))
    b2 = bias.astype(jnp.float32)
    if Np != w_out:
        b2 = jnp.pad(b2, (0, Np - w_out))
    b2 = b2.reshape(1, Np)

    grid = (Bp // tm, Np // tn, Kp // tk)  # reduction axis (K) last

    kernel = _mlp_kernel_acc_scratch if use_scratch else _mlp_kernel_acc_in_out
    scratch = [pltpu.VMEM((tm, tn), jnp.float32)] if use_scratch else []

    vmem_needed = _tile_vmem_bytes(tm, tn, tk, in_item, out_item, use_scratch)
    vmem_limit = int(min(budget, max(2 * vmem_needed, 32 * 1024 * 1024)))

    cost = pl.CostEstimate(
        flops=2 * B * w_in * w_out,
        transcendentals=0,
        bytes_accessed=(B * w_in + w_in * w_out) * in_item
        + w_out * 4 + B * w_out * out_item,
    )

    spec_kw = {}
    if input_buffering and input_buffering > 2:
        # Deeper buffering for DMA-exposed weight-streaming shapes (v7x).
        spec_kw = dict(pipeline_mode=pl.Buffered(int(input_buffering)))

    out = pl.pallas_call(
        kernel,
        out_shape=jax.ShapeDtypeStruct((Bp, Np), out_dtype),
        grid_spec=pltpu.PrefetchScalarGridSpec(
            num_scalar_prefetch=0,
            grid=grid,
            in_specs=[
                pl.BlockSpec((tm, tk), lambda i, j, k: (i, k), **spec_kw),  # x
                pl.BlockSpec((tk, tn), lambda i, j, k: (k, j), **spec_kw),  # weight.T
                pl.BlockSpec((1, tn), lambda i, j, k: (0, j)),              # bias
            ],
            out_specs=pl.BlockSpec((tm, tn), lambda i, j, k: (i, j)),
            scratch_shapes=scratch,
        ),
        compiler_params=pltpu.CompilerParams(
            dimension_semantics=("parallel", "parallel", "arbitrary"),
            vmem_limit_bytes=vmem_limit,
        ),
        cost_estimate=cost,
    )(x2, w_t, b2)

    if (Bp, Np) != (B, w_out):
        out = out[:B, :w_out]
    return out.reshape(*orig_lead, w_out)


def mlp_block_ref(x, weight, bias):
    # Pure-JAX reference matching torch: relu(x @ W.T + b)
    return jnp.maximum(x @ weight.T + bias, 0.0)


if __name__ == "__main__":
    key = jax.random.PRNGKey(0)
    k_x, k_w, k_b = jax.random.split(key, 3)

    B, w_in, w_out = 8, 32, 64

    x = jax.random.normal(k_x, (B, w_in), dtype=jnp.float32)
    # Parameters in nn.Linear(w_in, w_out, bias=True) layout: weight (w_out, w_in).
    weight = jax.random.normal(k_w, (w_out, w_in), dtype=jnp.float32) * 0.1
    bias = jax.random.normal(k_b, (w_out,), dtype=jnp.float32) * 0.1

    ref = mlp_block_ref(x, weight, bias)

    # f32 path (exact).
    out = jax.block_until_ready(mlp_block(x, weight, bias))
    assert out.shape == (B, w_out)
    assert jnp.allclose(out, ref, atol=1e-5, rtol=1e-5)

    # bf16 MXU path with f32 accumulation (recommended on v6e/v7x when
    # accuracy permits) -- lossy, so a looser tolerance.
    out_bf16 = jax.block_until_ready(
        mlp_block(x, weight, bias, compute_dtype=jnp.bfloat16))
    assert out_bf16.shape == (B, w_out)
    assert jnp.allclose(out_bf16, ref, atol=5e-2, rtol=5e-2)

    print("KERNEL_OK")
</pallas_src>

<mosaic_0001>
module attributes {stable_mosaic.version = 11 : i64} {
  func.func @_mlp_kernel_acc_in_out(%arg0: i32, %arg1: i32, %arg2: i32, %arg3: memref<8x128xf32, #tpu.memory_space<vmem>>, %arg4: memref<128x128xf32, #tpu.memory_space<vmem>>, %arg5: memref<1x128xf32, #tpu.memory_space<vmem>>, %arg6: memref<8x128xf32, #tpu.memory_space<vmem>>) attributes {dimension_semantics = [#tpu.dimension_semantics<parallel>, #tpu.dimension_semantics<parallel>, #tpu.dimension_semantics<arbitrary>], iteration_bounds = array<i64: 1, 1, 1>, scalar_prefetch = 0 : i64, scratch_operands = 0 : i64, tpu.core_type = #tpu.core_type<tc>, window_params = [{transform_indices = @transform_0, window_bounds = array<i64: 8, 128>}, {transform_indices = @transform_1, window_bounds = array<i64: 128, 128>}, {transform_indices = @transform_2, window_bounds = array<i64: 1, 128>}, {transform_indices = @transform_3, window_bounds = array<i64: 8, 128>}]} {
    %c0_i32 = arith.constant 0 : i32
    %0 = arith.cmpi eq, %arg2, %c0_i32 : i32
    %1 = arith.extui %0 : i1 to i32
    %c0_i32_0 = arith.constant 0 : i32
    %2 = arith.cmpi ne, %1, %c0_i32_0 : i32
    scf.if %2 {
      %cst_10 = arith.constant 0.000000e+00 : f32
      %12 = vector.broadcast %cst_10 : f32 to vector<8x128xf32>
      %c0_11 = arith.constant 0 : index
      %c0_12 = arith.constant 0 : index
      %13 = vector.load %arg6[%c0_11, %c0_12] : memref<8x128xf32, #tpu.memory_space<vmem>>, vector<8x128xf32>
      tpu.vector_store %arg6[%c0_11, %c0_12], %12 {strides = array<i32>} : memref<8x128xf32, #tpu.memory_space<vmem>>, vector<8x128xf32>,
    } else {
    }
    %c0 = arith.constant 0 : index
    %c0_1 = arith.constant 0 : index
    %3 = vector.load %arg6[%c0, %c0_1] : memref<8x128xf32, #tpu.memory_space<vmem>>, vector<8x128xf32>
    %c0_2 = arith.constant 0 : index
    %c0_3 = arith.constant 0 : index
    %4 = vector.load %arg3[%c0_2, %c0_3] : memref<8x128xf32, #tpu.memory_space<vmem>>, vector<8x128xf32>
    %c0_4 = arith.constant 0 : index
    %c0_5 = arith.constant 0 : index
    %5 = vector.load %arg4[%c0_4, %c0_5] : memref<128x128xf32, #tpu.memory_space<vmem>>, vector<128x128xf32>
    %cst = arith.constant dense<0.000000e+00> : vector<8x128xf32>
    %6 = tpu.matmul %4, %5, %cst {dimension_numbers = #tpu.dot_dimension_numbers<[1], [0], [0], [1], [0, 0, 1, 1], [], []>} : vector<8x128xf32>, vector<128x128xf32>, vector<8x128xf32> -> vector<8x128xf32>
    %7 = arith.addf %3, %6 : vector<8x128xf32>
    %c0_6 = arith.constant 0 : index
    %c0_7 = arith.constant 0 : index
    %8 = vector.load %arg6[%c0_6, %c0_7] : memref<8x128xf32, #tpu.memory_space<vmem>>, vector<8x128xf32>
    tpu.vector_store %arg6[%c0_6, %c0_7], %7 {strides = array<i32>} : memref<8x128xf32, #tpu.memory_space<vmem>>, vector<8x128xf32>,
    %c0_i32_8 = arith.constant 0 : i32
    %9 = arith.cmpi eq, %arg2, %c0_i32_8 : i32
    %10 = arith.extui %9 : i1 to i32
    %c0_i32_9 = arith.constant 0 : i32
    %11 = arith.cmpi ne, %10, %c0_i32_9 : i32
    scf.if %11 {
      %c0_10 = arith.constant 0 : index
      %c0_11 = arith.constant 0 : index
      %12 = vector.load %arg6[%c0_10, %c0_11] : memref<8x128xf32, #tpu.memory_space<vmem>>, vector<8x128xf32>
      %c0_12 = arith.constant 0 : index
      %c0_13 = arith.constant 0 : index
      %13 = vector.load %arg5[%c0_12, %c0_13] : memref<1x128xf32, #tpu.memory_space<vmem>>, vector<1x128xf32>
      %14 = vector.broadcast %13 : vector<1x128xf32> to vector<8x128xf32>
      %15 = arith.addf %12, %14 : vector<8x128xf32>
      %cst_14 = arith.constant 0.000000e+00 : f32
      %16 = vector.broadcast %cst_14 : f32 to vector<8x128xf32>
      %17 = arith.maximumf %15, %16 : vector<8x128xf32>
      %c0_15 = arith.constant 0 : index
      %c0_16 = arith.constant 0 : index
      %18 = vector.load %arg6[%c0_15, %c0_16] : memref<8x128xf32, #tpu.memory_space<vmem>>, vector<8x128xf32>
      tpu.vector_store %arg6[%c0_15, %c0_16], %17 {strides = array<i32>} : memref<8x128xf32, #tpu.memory_space<vmem>>, vector<8x128xf32>,
    } else {
    }
    return
  }
  func.func @transform_0(%arg0: i32, %arg1: i32, %arg2: i32) -> (i32, i32) {
    %c0_i32 = arith.constant 0 : i32
    return %arg0, %arg2 : i32, i32
  }
  func.func @transform_1(%arg0: i32, %arg1: i32, %arg2: i32) -> (i32, i32) {
    %c0_i32 = arith.constant 0 : i32
    return %arg2, %arg1 : i32, i32
  }
  func.func @transform_2(%arg0: i32, %arg1: i32, %arg2: i32) -> (i32, i32) {
    %c0_i32 = arith.constant 0 : i32
    %c0_i32_0 = arith.constant 0 : i32
    return %c0_i32, %arg1 : i32, i32
  }
  func.func @transform_3(%arg0: i32, %arg1: i32, %arg2: i32) -> (i32, i32) {
    %c0_i32 = arith.constant 0 : i32
    return %arg0, %arg1 : i32, i32
  }
}

</mosaic_0001>

<llo_original>
// kernel: tpu_custom_call.1
$region0: #{tpu_custom_call.1}
  #allocation0 [shape = 'u32[]', space=smem, size = 0x4, offset = 0x4, fixed_abs, tag = 'smem constant byte address 0x4 - core index']
  #allocation1 [shape = 'u32[72,128]{1,0:T(1,128)}', space=vmem, size = 0x9000, scoped, tag = 'internal scratch']
  %s0 = inlined_call_operand.hbm [shape: f32[8,128], index: 0, kind: input, shape index: {}]
  %s1 = inlined_call_operand.hbm [shape: f32[128,128], index: 1, kind: input, shape index: {}]
  %s2 = inlined_call_operand.vmem [shape: f32[1,128], index: 2, kind: input, shape index: {}]
  %s3 = inlined_call_operand.hbm [shape: f32[8,128], index: 3, kind: output, shape index: {}]
  %s4 = sld [smem:[#allocation0]]
  $region38: #{tpu_custom_call.1} parent=0
    _
  %s6 = ssub.s32 1, %s4
  %s7 = scalar_select 0, %s6, %s4
  $region1: #{tpu_custom_call.1} parent=0
    #allocation2 [shape = 'u8[4096]{0}', space=vmem, size = 0x1000, scoped, tag = 'input window, operand 0, single buffered']
    #allocation3 [shape = 's32[1]{0}', space=sflag, size = 0x4, scoped, tag = 'scoped memory for tpu_custom_call.1']
    #allocation4 [shape = 's32[1]{0}', space=sflag, size = 0x4, scoped, tag = 'scoped memory for tpu_custom_call.1']
    #allocation5 [shape = 'u8[65536]{0}', space=vmem, size = 0x10000, scoped, tag = 'input window, operand 1, single buffered']
    #allocation6 [shape = 's32[1]{0}', space=sflag, size = 0x4, scoped, tag = 'scoped memory for tpu_custom_call.1']
    #allocation7 [shape = 'u8[4096]{0}', space=vmem, size = 0x1000, scoped, tag = 'output window, operand 0, single buffered']
    %8 = vsyncpa [#allocation3], 0
    %9 = vsyncpa [#allocation6], 0
    %10 = vsyncpa [#allocation4], 0
    // Predicated region
    $region2: #{tpu_custom_call.1} parent=1 // pred_check
      _
    $region3: #{tpu_custom_call.1} parent=1 // pred_check_branch
      %12 = sbr.rel (0) target = $region5
    $region4: #{tpu_custom_call.1} parent=1 // pred_region
      %14 = vsyncadd [#allocation3], 0
      %s16 = sshll.u32 %s0, 4
      %s17 = int_to_ptr.hbm [resolvable:$true] %s16
      %s18 = sshll.u32 [#allocation2], 4
      %s19 = int_to_ptr.vmem [resolvable:$true] %s18
      %21 = dma.hbm_to_vmem [thread:$0]  %s17, 128, %s19, [#allocation3]
    $region5: #{tpu_custom_call.1} parent=1 // pred_fallthru
      _
    // Predicated region
    $region6: #{tpu_custom_call.1} parent=1 // pred_check
      _
    $region7: #{tpu_custom_call.1} parent=1 // pred_check_branch
      %23 = sbr.rel (0) target = $region9
    $region8: #{tpu_custom_call.1} parent=1 // pred_region
      %25 = vsyncadd [#allocation6], 0
      %s26 = sshll.u32 %s1, 4
      %s27 = int_to_ptr.hbm [resolvable:$true] %s26
      %s28 = sshll.u32 [#allocation5], 4
      %s29 = int_to_ptr.vmem [resolvable:$true] %s28
      %34 = dma.hbm_to_vmem [thread:$0]  %s27, 2048, %s29, [#allocation6], 128, 128, 8
    $region9: #{tpu_custom_call.1} parent=1 // pred_fallthru
      _
    // Predicated region
    $region10: #{tpu_custom_call.1} parent=1 // pred_check
      _
    $region11: #{tpu_custom_call.1} parent=1 // pred_check_branch
      %36 = sbr.rel (0) target = $region13
    $region12: #{tpu_custom_call.1} parent=1 // pred_region
      _
    $region13: #{tpu_custom_call.1} parent=1 // pred_fallthru
      _
    // Predicated region
    $region14: #{tpu_custom_call.1} parent=1 // pred_check
      _
    $region15: #{tpu_custom_call.1} parent=1 // pred_check_branch
      %38 = sbr.rel (0) target = $region17
    $region16: #{tpu_custom_call.1} parent=1 // pred_region
      %40 = dma.done [#allocation3], 128
    $region17: #{tpu_custom_call.1} parent=1 // pred_fallthru
      _
    // Predicated region
    $region18: #{tpu_custom_call.1} parent=1 // pred_check
      _
    $region19: #{tpu_custom_call.1} parent=1 // pred_check_branch
      %42 = sbr.rel (0) target = $region21
    $region20: #{tpu_custom_call.1} parent=1 // pred_region
      %44 = dma.done [#allocation6], 2048
    $region21: #{tpu_custom_call.1} parent=1 // pred_fallthru
      _
    %p45 = scmp.eq.s32.totalorder 0, 0
    // Predicated region
    $region22: #{tpu_custom_call.1} parent=1 // pred_check
      %p46 = pneg %p45
    $region23: #{tpu_custom_call.1} parent=1 // pred_check_branch
      %48 = sbr.rel (%p46) target = $region25
    $region24: #{tpu_custom_call.1} parent=1 // pred_region
      %49 = vst [vmem:[#allocation7] sm:$0xff] 0.0
    $region25: #{tpu_custom_call.1} parent=1 // pred_fallthru
      _
    %v50 = vld [vmem:[#allocation7] sm:$0xff]
    %v51 = vld [vmem:[#allocation2] sm:$0xff]
    %v52 = vld [vmem:[#allocation5] sm:$0xff]
    %v53 = vld [vmem:[#allocation5 + $0x8] sm:$0xff]
    %v54 = vld [vmem:[#allocation5 + $0x10] sm:$0xff]
    %v55 = vld [vmem:[#allocation5 + $0x18] sm:$0xff]
    %v56 = vld [vmem:[#allocation5 + $0x20] sm:$0xff]
    %v57 = vld [vmem:[#allocation5 + $0x28] sm:$0xff]
    %v58 = vld [vmem:[#allocation5 + $0x30] sm:$0xff]
    %v59 = vld [vmem:[#allocation5 + $0x38] sm:$0xff]
    %v60 = vld [vmem:[#allocation5 + $0x40] sm:$0xff]
    %v61 = vld [vmem:[#allocation5 + $0x48] sm:$0xff]
    %v62 = vld [vmem:[#allocation5 + $0x50] sm:$0xff]
    %v63 = vld [vmem:[#allocation5 + $0x58] sm:$0xff]
    %v64 = vld [vmem:[#allocation5 + $0x60] sm:$0xff]
    %v65 = vld [vmem:[#allocation5 + $0x68] sm:$0xff]
    %v66 = vld [vmem:[#allocation5 + $0x70] sm:$0xff]
    %v67 = vld [vmem:[#allocation5 + $0x78] sm:$0xff]
    %68 = vmatpush.msra.mxu0 %v67
    %69 = vmatpush.msra.mxu0 %v66
    %70 = vmatpush.msra.mxu0 %v65
    %71 = vmatpush.msra.mxu0 %v64
    %72 = vmatpush.msra.mxu0 %v63
    %73 = vmatpush.msra.mxu0 %v62
    %74 = vmatpush.msra.mxu0 %v61
    %75 = vmatpush.msra.mxu0 %v60
    %76 = vmatpush.msra.mxu0 %v59
    %77 = vmatpush.msra.mxu0 %v58
    %78 = vmatpush.msra.mxu0 %v57
    %79 = vmatpush.msra.mxu0 %v56
    %80 = vmatpush.msra.mxu0 %v55
    %81 = vmatpush.msra.mxu0 %v54
    %82 = vmatpush.msra.mxu0 %v53
    %83 = vmatpush.msra.mxu0 %v52
    %84 = vmatmul.f32.gmra.mxu0 %v51
    %v85 = vpop.f32.mrf.mxu0
    %v86 = vadd.f32 0.0, %v85
    %87 = vdwg.mxu0
    %v88 = vadd.f32 %v50, %v86
    %89 = vst [vmem:[#allocation7] sm:$0xff] %v88
    // Predicated region
    $region26: #{tpu_custom_call.1} parent=1 // pred_check
      %p90 = pneg %p45
    $region27: #{tpu_custom_call.1} parent=1 // pred_check_branch
      %92 = sbr.rel (%p90) target = $region29
    $region28: #{tpu_custom_call.1} parent=1 // pred_region
      %v93 = vld [vmem:[#allocation7] sm:$0xff]
      %v94 = vld [vmem:[%s2] sm:$0x1]
      %v96 = vperm.slane %v94, 0
      %v98 = vadd.f32 %v93, %v96
      %v99 = vmax.f32 %v98, 0.0
      %100 = vst [vmem:[#allocation7] sm:$0xff] %v99
    $region29: #{tpu_custom_call.1} parent=1 // pred_fallthru
      _
    // Predicated region
    $region30: #{tpu_custom_call.1} parent=1 // pred_check
      _
    $region31: #{tpu_custom_call.1} parent=1 // pred_check_branch
      %102 = sbr.rel (0) target = $region33
    $region32: #{tpu_custom_call.1} parent=1 // pred_region
      %104 = vsyncadd [#allocation4], 0
      %s106 = sshll.u32 [#allocation7], 4
      %s107 = int_to_ptr.vmem [resolvable:$true] %s106
      %s108 = sshll.u32 %s3, 4
      %s109 = int_to_ptr.hbm [resolvable:$true] %s108
      %111 = dma.vmem_to_hbm [thread:$0]  %s107, 128, %s109, [#allocation4]
    $region33: #{tpu_custom_call.1} parent=1 // pred_fallthru
      _
    // Predicated region
    $region34: #{tpu_custom_call.1} parent=1 // pred_check
      _
    $region35: #{tpu_custom_call.1} parent=1 // pred_check_branch
      %113 = sbr.rel (0) target = $region37
    $region36: #{tpu_custom_call.1} parent=1 // pred_region
      %115 = dma.done [#allocation4], 128
    $region37: #{tpu_custom_call.1} parent=1 // pred_fallthru
      _
    %116 = vsyncpa [#allocation3], 1
    %117 = vsyncpa [#allocation6], 1
    %118 = vsyncpa [#allocation4], 1

</llo_original>
